<compile_context>
chip_gen: v7x
topology: tpu7x:2x2x1
jax: 0.10.0
libtpu: 0.0.40
codegen_flags: <defaults>
</compile_context>

<pallas_src>
import functools

import jax
import jax.numpy as jnp
from jax.experimental import pallas as pl
from jax.experimental.pallas import tpu as pltpu

STATE_DIM = 3      # Pendulum-v1 observation_space.shape[0]
HIDDEN_DIM = 120   # hidden_dim = [120]
H_PAD = 128        # hidden padded to one lane/sublane-clean width
CHUNK = 8          # hidden-chunk height (one f32 sublane group)


def valuenet_kernel(xt_ref, w1t_ref, b1_ref, w2_ref, b2_ref, o_ref):
    """Feature-major critic forward on one batch tile.

    xt_ref : [STATE_DIM, TB]   input tile, batch on lanes (lane-dense)
    w1t_ref: [H_PAD, STATE_DIM] W1^T, hidden zero-padded 120->128
    b1_ref : [H_PAD, 1]
    w2_ref : [H_PAD, 1]
    b2_ref : [1, 1]             scalar, SMEM
    o_ref  : [1, TB]            lane-dense output tile
    """
    xt = xt_ref[...]                       # [sd, TB]
    sd, tb = xt.shape
    h_pad = w1t_ref.shape[0]
    n_chunks = h_pad // CHUNK              # 16

    # Running layer-2 accumulator; the [128, TB] hidden activation is never
    # materialized, which is what allows the large batch tile without spills.
    acc = jnp.zeros((CHUNK, tb), jnp.float32)

    for c in range(n_chunks):              # static unroll (16 chunks of 8 rows)
        lo = c * CHUNK
        w1c = w1t_ref[lo:lo + CHUNK, :]    # [CHUNK, sd]  sublane-aligned slice
        b1c = b1_ref[lo:lo + CHUNK, :]     # [CHUNK, 1]
        w2c = w2_ref[lo:lo + CHUNK, :]     # [CHUNK, 1]

        # Layer 1 on the VPU (K = 3 would leave the MXU >97% idle):
        #   h[k, b] = b1[k] + sum_i W1[i, k] * x[b, i]
        h = b1c
        for i in range(sd):                # static unroll (3)
            h = h + w1c[:, i:i + 1] * xt[i:i + 1, :]   # -> [CHUNK, TB]
        h = jnp.maximum(h, 0.0)            # ReLU

        acc = acc + h * w2c                # layer-2 partial products (VALU)

    # One tiny 8-sublane reduction at the end (XLU), not a 128-row one.
    y = jnp.sum(acc, axis=0, keepdims=True) + b2_ref[0, 0]   # [1, TB]
    o_ref[...] = y.astype(o_ref.dtype)


def _round_up(n, m):
    return ((n + m - 1) // m) * m


@functools.partial(jax.jit, static_argnames=("block_b",))
def value_net_forward(x, kernel_params, *, block_b=2048):
    """x: [B, STATE_DIM] float32 -> [B, 1] float32 (same semantics as ValueNet)."""
    w1t, b1c, w2c, b2s = kernel_params
    B, sd = x.shape
    h_pad = w1t.shape[0]

    # Tile selection (static under jit):
    #   * cap at block_b (default 2048; sweep 2048-8192 if desired)
    #   * shrink for small B (don't burn 2048 lanes of VPU work for 10 rows)
    #   * when B is large enough, guarantee >=2 tiles so the "parallel" axis
    #     actually shards across both v7x TensorCores.
    tb = max(128, min(block_b, _round_up(pl.cdiv(B, 2), 128)))
    num_tiles = pl.cdiv(B, tb)
    b_pad = num_tiles * tb

    # Feature-major, lane-dense input. Pure layout plumbing — inside this jit
    # it fuses with the surrounding computation instead of being a separate
    # launch + full HBM pass over x.
    xt = jnp.zeros((sd, b_pad), jnp.float32).at[:, :B].set(x.T.astype(jnp.float32))

    out = pl.pallas_call(
        valuenet_kernel,
        out_shape=jax.ShapeDtypeStruct((1, b_pad), jnp.float32),
        grid_spec=pltpu.PrefetchScalarGridSpec(
            num_scalar_prefetch=0,
            grid=(num_tiles,),
            in_specs=[
                pl.BlockSpec((sd, tb), lambda i: (0, i)),           # x tile
                pl.BlockSpec((h_pad, sd), lambda i: (0, 0)),        # W1^T (resident)
                pl.BlockSpec((h_pad, 1), lambda i: (0, 0)),         # b1   (resident)
                pl.BlockSpec((h_pad, 1), lambda i: (0, 0)),         # W2   (resident)
                pl.BlockSpec(memory_space=pltpu.MemorySpace.SMEM),  # b2 scalar
            ],
            out_specs=pl.BlockSpec((1, tb), lambda i: (0, i)),
        ),
        compiler_params=pltpu.CompilerParams(
            dimension_semantics=("parallel",),   # batch tiles shard across TCs (v7x)
        ),
    )(xt, w1t, b1c, w2c, b2s)

    return out[0, :B].reshape(B, 1)


def init_params(key, state_dim=STATE_DIM, hidden_dim=HIDDEN_DIM):
    # Deterministic init mimicking torch.nn.Linear default:
    # U(-1/sqrt(fan_in), 1/sqrt(fan_in)) for both weight and bias.
    k1, k2, k3, k4 = jax.random.split(key, 4)
    bound1 = 1.0 / jnp.sqrt(jnp.float32(state_dim))
    bound2 = 1.0 / jnp.sqrt(jnp.float32(hidden_dim))
    w1 = jax.random.uniform(k1, (state_dim, hidden_dim), jnp.float32, -bound1, bound1)
    b1 = jax.random.uniform(k2, (hidden_dim,), jnp.float32, -bound1, bound1)
    w2 = jax.random.uniform(k3, (hidden_dim, 1), jnp.float32, -bound2, bound2)
    b2 = jax.random.uniform(k4, (), jnp.float32, -bound2, bound2)
    return w1, b1, w2, b2


def prepare_kernel_params(w1, b1, w2, b2, h_pad=H_PAD):
    """Pad hidden 120->128 and lay out weights for the feature-major kernel."""
    state_dim, hidden = w1.shape
    w1t = jnp.zeros((h_pad, state_dim), jnp.float32).at[:hidden, :].set(w1.T)
    b1c = jnp.zeros((h_pad, 1), jnp.float32).at[:hidden, 0].set(b1)
    w2c = jnp.zeros((h_pad, 1), jnp.float32).at[:hidden, :].set(w2.reshape(-1, 1))
    b2s = jnp.asarray(b2, jnp.float32).reshape(1, 1)
    return w1t, b1c, w2c, b2s


def reference_forward(x, w1, b1, w2, b2):
    # Pure-JAX reference of the PyTorch forward pass.
    h = jnp.maximum(x @ w1 + b1, 0.0)
    return h @ w2 + b2


if __name__ == "__main__":
    key = jax.random.PRNGKey(0)
    k_params, k_x1, k_x2 = jax.random.split(key, 3)

    w1, b1, w2, b2 = init_params(k_params)
    kernel_params = prepare_kernel_params(w1, b1, w2, b2)

    # Small batch (rollout/inference regime): tile shrinks to 128 lanes,
    # exercises batch padding.
    x_small = jax.random.normal(k_x1, (10, STATE_DIM), jnp.float32)
    out_small = jax.block_until_ready(value_net_forward(x_small, kernel_params))
    ref_small = reference_forward(x_small, w1, b1, w2, b2)
    assert out_small.shape == (10, 1)
    assert jnp.allclose(out_small, ref_small, atol=1e-5, rtol=1e-5)

    # Medium batch: two 256-lane tiles -> multi-tile path + megacore sharding.
    x_med = jax.random.normal(k_x2, (300, STATE_DIM), jnp.float32)
    out_med = jax.block_until_ready(value_net_forward(x_med, kernel_params))
    ref_med = reference_forward(x_med, w1, b1, w2, b2)
    assert out_med.shape == (300, 1)
    assert jnp.allclose(out_med, ref_med, atol=1e-5, rtol=1e-5)

    print("KERNEL_OK")
</pallas_src>

<mosaic_0001>
module attributes {stable_mosaic.version = 11 : i64} {
  func.func @valuenet_kernel(%arg0: i32, %arg1: memref<3x128xf32, #tpu.memory_space<vmem>>, %arg2: memref<128x3xf32, #tpu.memory_space<vmem>>, %arg3: memref<128x1xf32, #tpu.memory_space<vmem>>, %arg4: memref<128x1xf32, #tpu.memory_space<vmem>>, %arg5: memref<1x1xf32, #tpu.memory_space<smem>>, %arg6: memref<1x128xf32, #tpu.memory_space<vmem>>) attributes {dimension_semantics = [#tpu.dimension_semantics<parallel>], iteration_bounds = array<i64: 1>, scalar_prefetch = 0 : i64, scratch_operands = 0 : i64, tpu.core_type = #tpu.core_type<tc>, window_params = [{transform_indices = @transform_0, window_bounds = array<i64: 3, 128>}, {pipeline_mode = #tpu.pipeline_mode<synchronous>, transform_indices = @transform_1, window_bounds = array<i64: 128, 3>}, {pipeline_mode = #tpu.pipeline_mode<synchronous>, transform_indices = @transform_2, window_bounds = array<i64: 128, 1>}, {pipeline_mode = #tpu.pipeline_mode<synchronous>, transform_indices = @transform_3, window_bounds = array<i64: 128, 1>}, {transform_indices = @transform_4, window_bounds = array<i64: 1, 1>}, {transform_indices = @transform_5, window_bounds = array<i64: 1, 128>}]} {
    %c0 = arith.constant 0 : index
    %c0_0 = arith.constant 0 : index
    %0 = vector.load %arg1[%c0, %c0_0] : memref<3x128xf32, #tpu.memory_space<vmem>>, vector<3x128xf32>
    %cst = arith.constant 0.000000e+00 : f32
    %1 = vector.broadcast %cst : f32 to vector<8x128xf32>
    %c0_1 = arith.constant 0 : index
    %c0_2 = arith.constant 0 : index
    %2 = vector.load %arg2[%c0_1, %c0_2] : memref<128x3xf32, #tpu.memory_space<vmem>>, vector<8x3xf32>
    %c0_3 = arith.constant 0 : index
    %c0_4 = arith.constant 0 : index
    %3 = vector.load %arg3[%c0_3, %c0_4] : memref<128x1xf32, #tpu.memory_space<vmem>>, vector<8x1xf32>
    %c0_5 = arith.constant 0 : index
    %c0_6 = arith.constant 0 : index
    %4 = vector.load %arg4[%c0_5, %c0_6] : memref<128x1xf32, #tpu.memory_space<vmem>>, vector<8x1xf32>
    %5 = vector.extract_strided_slice %2 {offsets = [0, 0], sizes = [8, 1], strides = [1, 1]} : vector<8x3xf32> to vector<8x1xf32>
    %6 = vector.extract_strided_slice %0 {offsets = [0, 0], sizes = [1, 128], strides = [1, 1]} : vector<3x128xf32> to vector<1x128xf32>
    %7 = vector.broadcast %5 : vector<8x1xf32> to vector<8x128xf32>
    %8 = vector.broadcast %6 : vector<1x128xf32> to vector<8x128xf32>
    %9 = arith.mulf %7, %8 : vector<8x128xf32>
    %10 = vector.broadcast %3 : vector<8x1xf32> to vector<8x128xf32>
    %11 = arith.addf %10, %9 : vector<8x128xf32>
    %12 = vector.extract_strided_slice %2 {offsets = [0, 1], sizes = [8, 1], strides = [1, 1]} : vector<8x3xf32> to vector<8x1xf32>
    %13 = vector.extract_strided_slice %0 {offsets = [1, 0], sizes = [1, 128], strides = [1, 1]} : vector<3x128xf32> to vector<1x128xf32>
    %14 = vector.broadcast %12 : vector<8x1xf32> to vector<8x128xf32>
    %15 = vector.broadcast %13 : vector<1x128xf32> to vector<8x128xf32>
    %16 = arith.mulf %14, %15 : vector<8x128xf32>
    %17 = arith.addf %11, %16 : vector<8x128xf32>
    %18 = vector.extract_strided_slice %2 {offsets = [0, 2], sizes = [8, 1], strides = [1, 1]} : vector<8x3xf32> to vector<8x1xf32>
    %19 = vector.extract_strided_slice %0 {offsets = [2, 0], sizes = [1, 128], strides = [1, 1]} : vector<3x128xf32> to vector<1x128xf32>
    %20 = vector.broadcast %18 : vector<8x1xf32> to vector<8x128xf32>
    %21 = vector.broadcast %19 : vector<1x128xf32> to vector<8x128xf32>
    %22 = arith.mulf %20, %21 : vector<8x128xf32>
    %23 = arith.addf %17, %22 : vector<8x128xf32>
    %cst_7 = arith.constant 0.000000e+00 : f32
    %24 = vector.broadcast %cst_7 : f32 to vector<8x128xf32>
    %25 = arith.maximumf %23, %24 : vector<8x128xf32>
    %26 = vector.broadcast %4 : vector<8x1xf32> to vector<8x128xf32>
    %27 = arith.mulf %25, %26 : vector<8x128xf32>
    %28 = arith.addf %1, %27 : vector<8x128xf32>
    %c8 = arith.constant 8 : index
    %c0_8 = arith.constant 0 : index
    %29 = vector.load %arg2[%c8, %c0_8] : memref<128x3xf32, #tpu.memory_space<vmem>>, vector<8x3xf32>
    %c8_9 = arith.constant 8 : index
    %c0_10 = arith.constant 0 : index
    %30 = vector.load %arg3[%c8_9, %c0_10] : memref<128x1xf32, #tpu.memory_space<vmem>>, vector<8x1xf32>
    %c8_11 = arith.constant 8 : index
    %c0_12 = arith.constant 0 : index
    %31 = vector.load %arg4[%c8_11, %c0_12] : memref<128x1xf32, #tpu.memory_space<vmem>>, vector<8x1xf32>
    %32 = vector.extract_strided_slice %29 {offsets = [0, 0], sizes = [8, 1], strides = [1, 1]} : vector<8x3xf32> to vector<8x1xf32>
    %33 = vector.extract_strided_slice %0 {offsets = [0, 0], sizes = [1, 128], strides = [1, 1]} : vector<3x128xf32> to vector<1x128xf32>
    %34 = vector.broadcast %32 : vector<8x1xf32> to vector<8x128xf32>
    %35 = vector.broadcast %33 : vector<1x128xf32> to vector<8x128xf32>
    %36 = arith.mulf %34, %35 : vector<8x128xf32>
    %37 = vector.broadcast %30 : vector<8x1xf32> to vector<8x128xf32>
    %38 = arith.addf %37, %36 : vector<8x128xf32>
    %39 = vector.extract_strided_slice %29 {offsets = [0, 1], sizes = [8, 1], strides = [1, 1]} : vector<8x3xf32> to vector<8x1xf32>
    %40 = vector.extract_strided_slice %0 {offsets = [1, 0], sizes = [1, 128], strides = [1, 1]} : vector<3x128xf32> to vector<1x128xf32>
    %41 = vector.broadcast %39 : vector<8x1xf32> to vector<8x128xf32>
    %42 = vector.broadcast %40 : vector<1x128xf32> to vector<8x128xf32>
    %43 = arith.mulf %41, %42 : vector<8x128xf32>
    %44 = arith.addf %38, %43 : vector<8x128xf32>
    %45 = vector.extract_strided_slice %29 {offsets = [0, 2], sizes = [8, 1], strides = [1, 1]} : vector<8x3xf32> to vector<8x1xf32>
    %46 = vector.extract_strided_slice %0 {offsets = [2, 0], sizes = [1, 128], strides = [1, 1]} : vector<3x128xf32> to vector<1x128xf32>
    %47 = vector.broadcast %45 : vector<8x1xf32> to vector<8x128xf32>
    %48 = vector.broadcast %46 : vector<1x128xf32> to vector<8x128xf32>
    %49 = arith.mulf %47, %48 : vector<8x128xf32>
    %50 = arith.addf %44, %49 : vector<8x128xf32>
    %cst_13 = arith.constant 0.000000e+00 : f32
    %51 = vector.broadcast %cst_13 : f32 to vector<8x128xf32>
    %52 = arith.maximumf %50, %51 : vector<8x128xf32>
    %53 = vector.broadcast %31 : vector<8x1xf32> to vector<8x128xf32>
    %54 = arith.mulf %52, %53 : vector<8x128xf32>
    %55 = arith.addf %28, %54 : vector<8x128xf32>
    %c16 = arith.constant 16 : index
    %c0_14 = arith.constant 0 : index
    %56 = vector.load %arg2[%c16, %c0_14] : memref<128x3xf32, #tpu.memory_space<vmem>>, vector<8x3xf32>
    %c16_15 = arith.constant 16 : index
    %c0_16 = arith.constant 0 : index
    %57 = vector.load %arg3[%c16_15, %c0_16] : memref<128x1xf32, #tpu.memory_space<vmem>>, vector<8x1xf32>
    %c16_17 = arith.constant 16 : index
    %c0_18 = arith.constant 0 : index
    %58 = vector.load %arg4[%c16_17, %c0_18] : memref<128x1xf32, #tpu.memory_space<vmem>>, vector<8x1xf32>
    %59 = vector.extract_strided_slice %56 {offsets = [0, 0], sizes = [8, 1], strides = [1, 1]} : vector<8x3xf32> to vector<8x1xf32>
    %60 = vector.extract_strided_slice %0 {offsets = [0, 0], sizes = [1, 128], strides = [1, 1]} : vector<3x128xf32> to vector<1x128xf32>
    %61 = vector.broadcast %59 : vector<8x1xf32> to vector<8x128xf32>
    %62 = vector.broadcast %60 : vector<1x128xf32> to vector<8x128xf32>
    %63 = arith.mulf %61, %62 : vector<8x128xf32>
    %64 = vector.broadcast %57 : vector<8x1xf32> to vector<8x128xf32>
    %65 = arith.addf %64, %63 : vector<8x128xf32>
    %66 = vector.extract_strided_slice %56 {offsets = [0, 1], sizes = [8, 1], strides = [1, 1]} : vector<8x3xf32> to vector<8x1xf32>
    %67 = vector.extract_strided_slice %0 {offsets = [1, 0], sizes = [1, 128], strides = [1, 1]} : vector<3x128xf32> to vector<1x128xf32>
    %68 = vector.broadcast %66 : vector<8x1xf32> to vector<8x128xf32>
    %69 = vector.broadcast %67 : vector<1x128xf32> to vector<8x128xf32>
    %70 = arith.mulf %68, %69 : vector<8x128xf32>
    %71 = arith.addf %65, %70 : vector<8x128xf32>
    %72 = vector.extract_strided_slice %56 {offsets = [0, 2], sizes = [8, 1], strides = [1, 1]} : vector<8x3xf32> to vector<8x1xf32>
    %73 = vector.extract_strided_slice %0 {offsets = [2, 0], sizes = [1, 128], strides = [1, 1]} : vector<3x128xf32> to vector<1x128xf32>
    %74 = vector.broadcast %72 : vector<8x1xf32> to vector<8x128xf32>
    %75 = vector.broadcast %73 : vector<1x128xf32> to vector<8x128xf32>
    %76 = arith.mulf %74, %75 : vector<8x128xf32>
    %77 = arith.addf %71, %76 : vector<8x128xf32>
    %cst_19 = arith.constant 0.000000e+00 : f32
    %78 = vector.broadcast %cst_19 : f32 to vector<8x128xf32>
    %79 = arith.maximumf %77, %78 : vector<8x128xf32>
    %80 = vector.broadcast %58 : vector<8x1xf32> to vector<8x128xf32>
    %81 = arith.mulf %79, %80 : vector<8x128xf32>
    %82 = arith.addf %55, %81 : vector<8x128xf32>
    %c24 = arith.constant 24 : index
    %c0_20 = arith.constant 0 : index
    %83 = vector.load %arg2[%c24, %c0_20] : memref<128x3xf32, #tpu.memory_space<vmem>>, vector<8x3xf32>
    %c24_21 = arith.constant 24 : index
    %c0_22 = arith.constant 0 : index
    %84 = vector.load %arg3[%c24_21, %c0_22] : memref<128x1xf32, #tpu.memory_space<vmem>>, vector<8x1xf32>
    %c24_23 = arith.constant 24 : index
    %c0_24 = arith.constant 0 : index
    %85 = vector.load %arg4[%c24_23, %c0_24] : memref<128x1xf32, #tpu.memory_space<vmem>>, vector<8x1xf32>
    %86 = vector.extract_strided_slice %83 {offsets = [0, 0], sizes = [8, 1], strides = [1, 1]} : vector<8x3xf32> to vector<8x1xf32>
    %87 = vector.extract_strided_slice %0 {offsets = [0, 0], sizes = [1, 128], strides = [1, 1]} : vector<3x128xf32> to vector<1x128xf32>
    %88 = vector.broadcast %86 : vector<8x1xf32> to vector<8x128xf32>
    %89 = vector.broadcast %87 : vector<1x128xf32> to vector<8x128xf32>
    %90 = arith.mulf %88, %89 : vector<8x128xf32>
    %91 = vector.broadcast %84 : vector<8x1xf32> to vector<8x128xf32>
    %92 = arith.addf %91, %90 : vector<8x128xf32>
    %93 = vector.extract_strided_slice %83 {offsets = [0, 1], sizes = [8, 1], strides = [1, 1]} : vector<8x3xf32> to vector<8x1xf32>
    %94 = vector.extract_strided_slice %0 {offsets = [1, 0], sizes = [1, 128], strides = [1, 1]} : vector<3x128xf32> to vector<1x128xf32>
    %95 = vector.broadcast %93 : vector<8x1xf32> to vector<8x128xf32>
    %96 = vector.broadcast %94 : vector<1x128xf32> to vector<8x128xf32>
    %97 = arith.mulf %95, %96 : vector<8x128xf32>
    %98 = arith.addf %92, %97 : vector<8x128xf32>
    %99 = vector.extract_strided_slice %83 {offsets = [0, 2], sizes = [8, 1], strides = [1, 1]} : vector<8x3xf32> to vector<8x1xf32>
    %100 = vector.extract_strided_slice %0 {offsets = [2, 0], sizes = [1, 128], strides = [1, 1]} : vector<3x128xf32> to vector<1x128xf32>
    %101 = vector.broadcast %99 : vector<8x1xf32> to vector<8x128xf32>
    %102 = vector.broadcast %100 : vector<1x128xf32> to vector<8x128xf32>
    %103 = arith.mulf %101, %102 : vector<8x128xf32>
    %104 = arith.addf %98, %103 : vector<8x128xf32>
    %cst_25 = arith.constant 0.000000e+00 : f32
    %105 = vector.broadcast %cst_25 : f32 to vector<8x128xf32>
    %106 = arith.maximumf %104, %105 : vector<8x128xf32>
    %107 = vector.broadcast %85 : vector<8x1xf32> to vector<8x128xf32>
    %108 = arith.mulf %106, %107 : vector<8x128xf32>
    %109 = arith.addf %82, %108 : vector<8x128xf32>
    %c32 = arith.constant 32 : index
    %c0_26 = arith.constant 0 : index
    %110 = vector.load %arg2[%c32, %c0_26] : memref<128x3xf32, #tpu.memory_space<vmem>>, vector<8x3xf32>
    %c32_27 = arith.constant 32 : index
    %c0_28 = arith.constant 0 : index
    %111 = vector.load %arg3[%c32_27, %c0_28] : memref<128x1xf32, #tpu.memory_space<vmem>>, vector<8x1xf32>
    %c32_29 = arith.constant 32 : index
    %c0_30 = arith.constant 0 : index
    %112 = vector.load %arg4[%c32_29, %c0_30] : memref<128x1xf32, #tpu.memory_space<vmem>>, vector<8x1xf32>
    %113 = vector.extract_strided_slice %110 {offsets = [0, 0], sizes = [8, 1], strides = [1, 1]} : vector<8x3xf32> to vector<8x1xf32>
    %114 = vector.extract_strided_slice %0 {offsets = [0, 0], sizes = [1, 128], strides = [1, 1]} : vector<3x128xf32> to vector<1x128xf32>
    %115 = vector.broadcast %113 : vector<8x1xf32> to vector<8x128xf32>
    %116 = vector.broadcast %114 : vector<1x128xf32> to vector<8x128xf32>
    %117 = arith.mulf %115, %116 : vector<8x128xf32>
    %118 = vector.broadcast %111 : vector<8x1xf32> to vector<8x128xf32>
    %119 = arith.addf %118, %117 : vector<8x128xf32>
    %120 = vector.extract_strided_slice %110 {offsets = [0, 1], sizes = [8, 1], strides = [1, 1]} : vector<8x3xf32> to vector<8x1xf32>
    %121 = vector.extract_strided_slice %0 {offsets = [1, 0], sizes = [1, 128], strides = [1, 1]} : vector<3x128xf32> to vector<1x128xf32>
    %122 = vector.broadcast %120 : vector<8x1xf32> to vector<8x128xf32>
    %123 = vector.broadcast %121 : vector<1x128xf32> to vector<8x128xf32>
    %124 = arith.mulf %122, %123 : vector<8x128xf32>
    %125 = arith.addf %119, %124 : vector<8x128xf32>
    %126 = vector.extract_strided_slice %110 {offsets = [0, 2], sizes = [8, 1], strides = [1, 1]} : vector<8x3xf32> to vector<8x1xf32>
    %127 = vector.extract_strided_slice %0 {offsets = [2, 0], sizes = [1, 128], strides = [1, 1]} : vector<3x128xf32> to vector<1x128xf32>
    %128 = vector.broadcast %126 : vector<8x1xf32> to vector<8x128xf32>
    %129 = vector.broadcast %127 : vector<1x128xf32> to vector<8x128xf32>
    %130 = arith.mulf %128, %129 : vector<8x128xf32>
    %131 = arith.addf %125, %130 : vector<8x128xf32>
    %cst_31 = arith.constant 0.000000e+00 : f32
    %132 = vector.broadcast %cst_31 : f32 to vector<8x128xf32>
    %133 = arith.maximumf %131, %132 : vector<8x128xf32>
    %134 = vector.broadcast %112 : vector<8x1xf32> to vector<8x128xf32>
    %135 = arith.mulf %133, %134 : vector<8x128xf32>
    %136 = arith.addf %109, %135 : vector<8x128xf32>
    %c40 = arith.constant 40 : index
    %c0_32 = arith.constant 0 : index
    %137 = vector.load %arg2[%c40, %c0_32] : memref<128x3xf32, #tpu.memory_space<vmem>>, vector<8x3xf32>
    %c40_33 = arith.constant 40 : index
    %c0_34 = arith.constant 0 : index
    %138 = vector.load %arg3[%c40_33, %c0_34] : memref<128x1xf32, #tpu.memory_space<vmem>>, vector<8x1xf32>
    %c40_35 = arith.constant 40 : index
    %c0_36 = arith.constant 0 : index
    %139 = vector.load %arg4[%c40_35, %c0_36] : memref<128x1xf32, #tpu.memory_space<vmem>>, vector<8x1xf32>
    %140 = vector.extract_strided_slice %137 {offsets = [0, 0], sizes = [8, 1], strides = [1, 1]} : vector<8x3xf32> to vector<8x1xf32>
    %141 = vector.extract_strided_slice %0 {offsets = [0, 0], sizes = [1, 128], strides = [1, 1]} : vector<3x128xf32> to vector<1x128xf32>
    %142 = vector.broadcast %140 : vector<8x1xf32> to vector<8x128xf32>
    %143 = vector.broadcast %141 : vector<1x128xf32> to vector<8x128xf32>
    %144 = arith.mulf %142, %143 : vector<8x128xf32>
    %145 = vector.broadcast %138 : vector<8x1xf32> to vector<8x128xf32>
    %146 = arith.addf %145, %144 : vector<8x128xf32>
    %147 = vector.extract_strided_slice %137 {offsets = [0, 1], sizes = [8, 1], strides = [1, 1]} : vector<8x3xf32> to vector<8x1xf32>
    %148 = vector.extract_strided_slice %0 {offsets = [1, 0], sizes = [1, 128], strides = [1, 1]} : vector<3x128xf32> to vector<1x128xf32>
    %149 = vector.broadcast %147 : vector<8x1xf32> to vector<8x128xf32>
    %150 = vector.broadcast %148 : vector<1x128xf32> to vector<8x128xf32>
    %151 = arith.mulf %149, %150 : vector<8x128xf32>
    %152 = arith.addf %146, %151 : vector<8x128xf32>
    %153 = vector.extract_strided_slice %137 {offsets = [0, 2], sizes = [8, 1], strides = [1, 1]} : vector<8x3xf32> to vector<8x1xf32>
    %154 = vector.extract_strided_slice %0 {offsets = [2, 0], sizes = [1, 128], strides = [1, 1]} : vector<3x128xf32> to vector<1x128xf32>
    %155 = vector.broadcast %153 : vector<8x1xf32> to vector<8x128xf32>
    %156 = vector.broadcast %154 : vector<1x128xf32> to vector<8x128xf32>
    %157 = arith.mulf %155, %156 : vector<8x128xf32>
    %158 = arith.addf %152, %157 : vector<8x128xf32>
    %cst_37 = arith.constant 0.000000e+00 : f32
    %159 = vector.broadcast %cst_37 : f32 to vector<8x128xf32>
    %160 = arith.maximumf %158, %159 : vector<8x128xf32>
    %161 = vector.broadcast %139 : vector<8x1xf32> to vector<8x128xf32>
    %162 = arith.mulf %160, %161 : vector<8x128xf32>
    %163 = arith.addf %136, %162 : vector<8x128xf32>
    %c48 = arith.constant 48 : index
    %c0_38 = arith.constant 0 : index
    %164 = vector.load %arg2[%c48, %c0_38] : memref<128x3xf32, #tpu.memory_space<vmem>>, vector<8x3xf32>
    %c48_39 = arith.constant 48 : index
    %c0_40 = arith.constant 0 : index
    %165 = vector.load %arg3[%c48_39, %c0_40] : memref<128x1xf32, #tpu.memory_space<vmem>>, vector<8x1xf32>
    %c48_41 = arith.constant 48 : index
    %c0_42 = arith.constant 0 : index
    %166 = vector.load %arg4[%c48_41, %c0_42] : memref<128x1xf32, #tpu.memory_space<vmem>>, vector<8x1xf32>
    %167 = vector.extract_strided_slice %164 {offsets = [0, 0], sizes = [8, 1], strides = [1, 1]} : vector<8x3xf32> to vector<8x1xf32>
    %168 = vector.extract_strided_slice %0 {offsets = [0, 0], sizes = [1, 128], strides = [1, 1]} : vector<3x128xf32> to vector<1x128xf32>
    %169 = vector.broadcast %167 : vector<8x1xf32> to vector<8x128xf32>
    %170 = vector.broadcast %168 : vector<1x128xf32> to vector<8x128xf32>
    %171 = arith.mulf %169, %170 : vector<8x128xf32>
    %172 = vector.broadcast %165 : vector<8x1xf32> to vector<8x128xf32>
    %173 = arith.addf %172, %171 : vector<8x128xf32>
    %174 = vector.extract_strided_slice %164 {offsets = [0, 1], sizes = [8, 1], strides = [1, 1]} : vector<8x3xf32> to vector<8x1xf32>
    %175 = vector.extract_strided_slice %0 {offsets = [1, 0], sizes = [1, 128], strides = [1, 1]} : vector<3x128xf32> to vector<1x128xf32>
    %176 = vector.broadcast %174 : vector<8x1xf32> to vector<8x128xf32>
    %177 = vector.broadcast %175 : vector<1x128xf32> to vector<8x128xf32>
    %178 = arith.mulf %176, %177 : vector<8x128xf32>
    %179 = arith.addf %173, %178 : vector<8x128xf32>
    %180 = vector.extract_strided_slice %164 {offsets = [0, 2], sizes = [8, 1], strides = [1, 1]} : vector<8x3xf32> to vector<8x1xf32>
    %181 = vector.extract_strided_slice %0 {offsets = [2, 0], sizes = [1, 128], strides = [1, 1]} : vector<3x128xf32> to vector<1x128xf32>
    %182 = vector.broadcast %180 : vector<8x1xf32> to vector<8x128xf32>
    %183 = vector.broadcast %181 : vector<1x128xf32> to vector<8x128xf32>
    %184 = arith.mulf %182, %183 : vector<8x128xf32>
    %185 = arith.addf %179, %184 : vector<8x128xf32>
    %cst_43 = arith.constant 0.000000e+00 : f32
    %186 = vector.broadcast %cst_43 : f32 to vector<8x128xf32>
    %187 = arith.maximumf %185, %186 : vector<8x128xf32>
    %188 = vector.broadcast %166 : vector<8x1xf32> to vector<8x128xf32>
    %189 = arith.mulf %187, %188 : vector<8x128xf32>
    %190 = arith.addf %163, %189 : vector<8x128xf32>
    %c56 = arith.constant 56 : index
    %c0_44 = arith.constant 0 : index
    %191 = vector.load %arg2[%c56, %c0_44] : memref<128x3xf32, #tpu.memory_space<vmem>>, vector<8x3xf32>
    %c56_45 = arith.constant 56 : index
    %c0_46 = arith.constant 0 : index
    %192 = vector.load %arg3[%c56_45, %c0_46] : memref<128x1xf32, #tpu.memory_space<vmem>>, vector<8x1xf32>
    %c56_47 = arith.constant 56 : index
    %c0_48 = arith.constant 0 : index
    %193 = vector.load %arg4[%c56_47, %c0_48] : memref<128x1xf32, #tpu.memory_space<vmem>>, vector<8x1xf32>
    %194 = vector.extract_strided_slice %191 {offsets = [0, 0], sizes = [8, 1], strides = [1, 1]} : vector<8x3xf32> to vector<8x1xf32>
    %195 = vector.extract_strided_slice %0 {offsets = [0, 0], sizes = [1, 128], strides = [1, 1]} : vector<3x128xf32> to vector<1x128xf32>
    %196 = vector.broadcast %194 : vector<8x1xf32> to vector<8x128xf32>
    %197 = vector.broadcast %195 : vector<1x128xf32> to vector<8x128xf32>
    %198 = arith.mulf %196, %197 : vector<8x128xf32>
    %199 = vector.broadcast %192 : vector<8x1xf32> to vector<8x128xf32>
    %200 = arith.addf %199, %198 : vector<8x128xf32>
    %201 = vector.extract_strided_slice %191 {offsets = [0, 1], sizes = [8, 1], strides = [1, 1]} : vector<8x3xf32> to vector<8x1xf32>
    %202 = vector.extract_strided_slice %0 {offsets = [1, 0], sizes = [1, 128], strides = [1, 1]} : vector<3x128xf32> to vector<1x128xf32>
    %203 = vector.broadcast %201 : vector<8x1xf32> to vector<8x128xf32>
    %204 = vector.broadcast %202 : vector<1x128xf32> to vector<8x128xf32>
    %205 = arith.mulf %203, %204 : vector<8x128xf32>
    %206 = arith.addf %200, %205 : vector<8x128xf32>
    %207 = vector.extract_strided_slice %191 {offsets = [0, 2], sizes = [8, 1], strides = [1, 1]} : vector<8x3xf32> to vector<8x1xf32>
    %208 = vector.extract_strided_slice %0 {offsets = [2, 0], sizes = [1, 128], strides = [1, 1]} : vector<3x128xf32> to vector<1x128xf32>
    %209 = vector.broadcast %207 : vector<8x1xf32> to vector<8x128xf32>
    %210 = vector.broadcast %208 : vector<1x128xf32> to vector<8x128xf32>
    %211 = arith.mulf %209, %210 : vector<8x128xf32>
    %212 = arith.addf %206, %211 : vector<8x128xf32>
    %cst_49 = arith.constant 0.000000e+00 : f32
    %213 = vector.broadcast %cst_49 : f32 to vector<8x128xf32>
    %214 = arith.maximumf %212, %213 : vector<8x128xf32>
    %215 = vector.broadcast %193 : vector<8x1xf32> to vector<8x128xf32>
    %216 = arith.mulf %214, %215 : vector<8x128xf32>
    %217 = arith.addf %190, %216 : vector<8x128xf32>
    %c64 = arith.constant 64 : index
    %c0_50 = arith.constant 0 : index
    %218 = vector.load %arg2[%c64, %c0_50] : memref<128x3xf32, #tpu.memory_space<vmem>>, vector<8x3xf32>
    %c64_51 = arith.constant 64 : index
    %c0_52 = arith.constant 0 : index
    %219 = vector.load %arg3[%c64_51, %c0_52] : memref<128x1xf32, #tpu.memory_space<vmem>>, vector<8x1xf32>
    %c64_53 = arith.constant 64 : index
    %c0_54 = arith.constant 0 : index
    %220 = vector.load %arg4[%c64_53, %c0_54] : memref<128x1xf32, #tpu.memory_space<vmem>>, vector<8x1xf32>
    %221 = vector.extract_strided_slice %218 {offsets = [0, 0], sizes = [8, 1], strides = [1, 1]} : vector<8x3xf32> to vector<8x1xf32>
    %222 = vector.extract_strided_slice %0 {offsets = [0, 0], sizes = [1, 128], strides = [1, 1]} : vector<3x128xf32> to vector<1x128xf32>
    %223 = vector.broadcast %221 : vector<8x1xf32> to vector<8x128xf32>
    %224 = vector.broadcast %222 : vector<1x128xf32> to vector<8x128xf32>
    %225 = arith.mulf %223, %224 : vector<8x128xf32>
    %226 = vector.broadcast %219 : vector<8x1xf32> to vector<8x128xf32>
    %227 = arith.addf %226, %225 : vector<8x128xf32>
    %228 = vector.extract_strided_slice %218 {offsets = [0, 1], sizes = [8, 1], strides = [1, 1]} : vector<8x3xf32> to vector<8x1xf32>
    %229 = vector.extract_strided_slice %0 {offsets = [1, 0], sizes = [1, 128], strides = [1, 1]} : vector<3x128xf32> to vector<1x128xf32>
    %230 = vector.broadcast %228 : vector<8x1xf32> to vector<8x128xf32>
    %231 = vector.broadcast %229 : vector<1x128xf32> to vector<8x128xf32>
    %232 = arith.mulf %230, %231 : vector<8x128xf32>
    %233 = arith.addf %227, %232 : vector<8x128xf32>
    %234 = vector.extract_strided_slice %218 {offsets = [0, 2], sizes = [8, 1], strides = [1, 1]} : vector<8x3xf32> to vector<8x1xf32>
    %235 = vector.extract_strided_slice %0 {offsets = [2, 0], sizes = [1, 128], strides = [1, 1]} : vector<3x128xf32> to vector<1x128xf32>
    %236 = vector.broadcast %234 : vector<8x1xf32> to vector<8x128xf32>
    %237 = vector.broadcast %235 : vector<1x128xf32> to vector<8x128xf32>
    %238 = arith.mulf %236, %237 : vector<8x128xf32>
    %239 = arith.addf %233, %238 : vector<8x128xf32>
    %cst_55 = arith.constant 0.000000e+00 : f32
    %240 = vector.broadcast %cst_55 : f32 to vector<8x128xf32>
    %241 = arith.maximumf %239, %240 : vector<8x128xf32>
    %242 = vector.broadcast %220 : vector<8x1xf32> to vector<8x128xf32>
    %243 = arith.mulf %241, %242 : vector<8x128xf32>
    %244 = arith.addf %217, %243 : vector<8x128xf32>
    %c72 = arith.constant 72 : index
    %c0_56 = arith.constant 0 : index
    %245 = vector.load %arg2[%c72, %c0_56] : memref<128x3xf32, #tpu.memory_space<vmem>>, vector<8x3xf32>
    %c72_57 = arith.constant 72 : index
    %c0_58 = arith.constant 0 : index
    %246 = vector.load %arg3[%c72_57, %c0_58] : memref<128x1xf32, #tpu.memory_space<vmem>>, vector<8x1xf32>
    %c72_59 = arith.constant 72 : index
    %c0_60 = arith.constant 0 : index
    %247 = vector.load %arg4[%c72_59, %c0_60] : memref<128x1xf32, #tpu.memory_space<vmem>>, vector<8x1xf32>
    %248 = vector.extract_strided_slice %245 {offsets = [0, 0], sizes = [8, 1], strides = [1, 1]} : vector<8x3xf32> to vector<8x1xf32>
    %249 = vector.extract_strided_slice %0 {offsets = [0, 0], sizes = [1, 128], strides = [1, 1]} : vector<3x128xf32> to vector<1x128xf32>
    %250 = vector.broadcast %248 : vector<8x1xf32> to vector<8x128xf32>
    %251 = vector.broadcast %249 : vector<1x128xf32> to vector<8x128xf32>
    %252 = arith.mulf %250, %251 : vector<8x128xf32>
    %253 = vector.broadcast %246 : vector<8x1xf32> to vector<8x128xf32>
    %254 = arith.addf %253, %252 : vector<8x128xf32>
    %255 = vector.extract_strided_slice %245 {offsets = [0, 1], sizes = [8, 1], strides = [1, 1]} : vector<8x3xf32> to vector<8x1xf32>
    %256 = vector.extract_strided_slice %0 {offsets = [1, 0], sizes = [1, 128], strides = [1, 1]} : vector<3x128xf32> to vector<1x128xf32>
    %257 = vector.broadcast %255 : vector<8x1xf32> to vector<8x128xf32>
    %258 = vector.broadcast %256 : vector<1x128xf32> to vector<8x128xf32>
    %259 = arith.mulf %257, %258 : vector<8x128xf32>
    %260 = arith.addf %254, %259 : vector<8x128xf32>
    %261 = vector.extract_strided_slice %245 {offsets = [0, 2], sizes = [8, 1], strides = [1, 1]} : vector<8x3xf32> to vector<8x1xf32>
    %262 = vector.extract_strided_slice %0 {offsets = [2, 0], sizes = [1, 128], strides = [1, 1]} : vector<3x128xf32> to vector<1x128xf32>
    %263 = vector.broadcast %261 : vector<8x1xf32> to vector<8x128xf32>
    %264 = vector.broadcast %262 : vector<1x128xf32> to vector<8x128xf32>
    %265 = arith.mulf %263, %264 : vector<8x128xf32>
    %266 = arith.addf %260, %265 : vector<8x128xf32>
    %cst_61 = arith.constant 0.000000e+00 : f32
    %267 = vector.broadcast %cst_61 : f32 to vector<8x128xf32>
    %268 = arith.maximumf %266, %267 : vector<8x128xf32>
    %269 = vector.broadcast %247 : vector<8x1xf32> to vector<8x128xf32>
    %270 = arith.mulf %268, %269 : vector<8x128xf32>
    %271 = arith.addf %244, %270 : vector<8x128xf32>
    %c80 = arith.constant 80 : index
    %c0_62 = arith.constant 0 : index
    %272 = vector.load %arg2[%c80, %c0_62] : memref<128x3xf32, #tpu.memory_space<vmem>>, vector<8x3xf32>
    %c80_63 = arith.constant 80 : index
    %c0_64 = arith.constant 0 : index
    %273 = vector.load %arg3[%c80_63, %c0_64] : memref<128x1xf32, #tpu.memory_space<vmem>>, vector<8x1xf32>
    %c80_65 = arith.constant 80 : index
    %c0_66 = arith.constant 0 : index
    %274 = vector.load %arg4[%c80_65, %c0_66] : memref<128x1xf32, #tpu.memory_space<vmem>>, vector<8x1xf32>
    %275 = vector.extract_strided_slice %272 {offsets = [0, 0], sizes = [8, 1], strides = [1, 1]} : vector<8x3xf32> to vector<8x1xf32>
    %276 = vector.extract_strided_slice %0 {offsets = [0, 0], sizes = [1, 128], strides = [1, 1]} : vector<3x128xf32> to vector<1x128xf32>
    %277 = vector.broadcast %275 : vector<8x1xf32> to vector<8x128xf32>
    %278 = vector.broadcast %276 : vector<1x128xf32> to vector<8x128xf32>
    %279 = arith.mulf %277, %278 : vector<8x128xf32>
    %280 = vector.broadcast %273 : vector<8x1xf32> to vector<8x128xf32>
    %281 = arith.addf %280, %279 : vector<8x128xf32>
    %282 = vector.extract_strided_slice %272 {offsets = [0, 1], sizes = [8, 1], strides = [1, 1]} : vector<8x3xf32> to vector<8x1xf32>
    %283 = vector.extract_strided_slice %0 {offsets = [1, 0], sizes = [1, 128], strides = [1, 1]} : vector<3x128xf32> to vector<1x128xf32>
    %284 = vector.broadcast %282 : vector<8x1xf32> to vector<8x128xf32>
    %285 = vector.broadcast %283 : vector<1x128xf32> to vector<8x128xf32>
    %286 = arith.mulf %284, %285 : vector<8x128xf32>
    %287 = arith.addf %281, %286 : vector<8x128xf32>
    %288 = vector.extract_strided_slice %272 {offsets = [0, 2], sizes = [8, 1], strides = [1, 1]} : vector<8x3xf32> to vector<8x1xf32>
    %289 = vector.extract_strided_slice %0 {offsets = [2, 0], sizes = [1, 128], strides = [1, 1]} : vector<3x128xf32> to vector<1x128xf32>
    %290 = vector.broadcast %288 : vector<8x1xf32> to vector<8x128xf32>
    %291 = vector.broadcast %289 : vector<1x128xf32> to vector<8x128xf32>
    %292 = arith.mulf %290, %291 : vector<8x128xf32>
    %293 = arith.addf %287, %292 : vector<8x128xf32>
    %cst_67 = arith.constant 0.000000e+00 : f32
    %294 = vector.broadcast %cst_67 : f32 to vector<8x128xf32>
    %295 = arith.maximumf %293, %294 : vector<8x128xf32>
    %296 = vector.broadcast %274 : vector<8x1xf32> to vector<8x128xf32>
    %297 = arith.mulf %295, %296 : vector<8x128xf32>
    %298 = arith.addf %271, %297 : vector<8x128xf32>
    %c88 = arith.constant 88 : index
    %c0_68 = arith.constant 0 : index
    %299 = vector.load %arg2[%c88, %c0_68] : memref<128x3xf32, #tpu.memory_space<vmem>>, vector<8x3xf32>
    %c88_69 = arith.constant 88 : index
    %c0_70 = arith.constant 0 : index
    %300 = vector.load %arg3[%c88_69, %c0_70] : memref<128x1xf32, #tpu.memory_space<vmem>>, vector<8x1xf32>
    %c88_71 = arith.constant 88 : index
    %c0_72 = arith.constant 0 : index
    %301 = vector.load %arg4[%c88_71, %c0_72] : memref<128x1xf32, #tpu.memory_space<vmem>>, vector<8x1xf32>
    %302 = vector.extract_strided_slice %299 {offsets = [0, 0], sizes = [8, 1], strides = [1, 1]} : vector<8x3xf32> to vector<8x1xf32>
    %303 = vector.extract_strided_slice %0 {offsets = [0, 0], sizes = [1, 128], strides = [1, 1]} : vector<3x128xf32> to vector<1x128xf32>
    %304 = vector.broadcast %302 : vector<8x1xf32> to vector<8x128xf32>
    %305 = vector.broadcast %303 : vector<1x128xf32> to vector<8x128xf32>
    %306 = arith.mulf %304, %305 : vector<8x128xf32>
    %307 = vector.broadcast %300 : vector<8x1xf32> to vector<8x128xf32>
    %308 = arith.addf %307, %306 : vector<8x128xf32>
    %309 = vector.extract_strided_slice %299 {offsets = [0, 1], sizes = [8, 1], strides = [1, 1]} : vector<8x3xf32> to vector<8x1xf32>
    %310 = vector.extract_strided_slice %0 {offsets = [1, 0], sizes = [1, 128], strides = [1, 1]} : vector<3x128xf32> to vector<1x128xf32>
    %311 = vector.broadcast %309 : vector<8x1xf32> to vector<8x128xf32>
    %312 = vector.broadcast %310 : vector<1x128xf32> to vector<8x128xf32>
    %313 = arith.mulf %311, %312 : vector<8x128xf32>
    %314 = arith.addf %308, %313 : vector<8x128xf32>
    %315 = vector.extract_strided_slice %299 {offsets = [0, 2], sizes = [8, 1], strides = [1, 1]} : vector<8x3xf32> to vector<8x1xf32>
    %316 = vector.extract_strided_slice %0 {offsets = [2, 0], sizes = [1, 128], strides = [1, 1]} : vector<3x128xf32> to vector<1x128xf32>
    %317 = vector.broadcast %315 : vector<8x1xf32> to vector<8x128xf32>
    %318 = vector.broadcast %316 : vector<1x128xf32> to vector<8x128xf32>
    %319 = arith.mulf %317, %318 : vector<8x128xf32>
    %320 = arith.addf %314, %319 : vector<8x128xf32>
    %cst_73 = arith.constant 0.000000e+00 : f32
    %321 = vector.broadcast %cst_73 : f32 to vector<8x128xf32>
    %322 = arith.maximumf %320, %321 : vector<8x128xf32>
    %323 = vector.broadcast %301 : vector<8x1xf32> to vector<8x128xf32>
    %324 = arith.mulf %322, %323 : vector<8x128xf32>
    %325 = arith.addf %298, %324 : vector<8x128xf32>
    %c96 = arith.constant 96 : index
    %c0_74 = arith.constant 0 : index
    %326 = vector.load %arg2[%c96, %c0_74] : memref<128x3xf32, #tpu.memory_space<vmem>>, vector<8x3xf32>
    %c96_75 = arith.constant 96 : index
    %c0_76 = arith.constant 0 : index
    %327 = vector.load %arg3[%c96_75, %c0_76] : memref<128x1xf32, #tpu.memory_space<vmem>>, vector<8x1xf32>
    %c96_77 = arith.constant 96 : index
    %c0_78 = arith.constant 0 : index
    %328 = vector.load %arg4[%c96_77, %c0_78] : memref<128x1xf32, #tpu.memory_space<vmem>>, vector<8x1xf32>
    %329 = vector.extract_strided_slice %326 {offsets = [0, 0], sizes = [8, 1], strides = [1, 1]} : vector<8x3xf32> to vector<8x1xf32>
    %330 = vector.extract_strided_slice %0 {offsets = [0, 0], sizes = [1, 128], strides = [1, 1]} : vector<3x128xf32> to vector<1x128xf32>
    %331 = vector.broadcast %329 : vector<8x1xf32> to vector<8x128xf32>
    %332 = vector.broadcast %330 : vector<1x128xf32> to vector<8x128xf32>
    %333 = arith.mulf %331, %332 : vector<8x128xf32>
    %334 = vector.broadcast %327 : vector<8x1xf32> to vector<8x128xf32>
    %335 = arith.addf %334, %333 : vector<8x128xf32>
    %336 = vector.extract_strided_slice %326 {offsets = [0, 1], sizes = [8, 1], strides = [1, 1]} : vector<8x3xf32> to vector<8x1xf32>
    %337 = vector.extract_strided_slice %0 {offsets = [1, 0], sizes = [1, 128], strides = [1, 1]} : vector<3x128xf32> to vector<1x128xf32>
    %338 = vector.broadcast %336 : vector<8x1xf32> to vector<8x128xf32>
    %339 = vector.broadcast %337 : vector<1x128xf32> to vector<8x128xf32>
    %340 = arith.mulf %338, %339 : vector<8x128xf32>
    %341 = arith.addf %335, %340 : vector<8x128xf32>
    %342 = vector.extract_strided_slice %326 {offsets = [0, 2], sizes = [8, 1], strides = [1, 1]} : vector<8x3xf32> to vector<8x1xf32>
    %343 = vector.extract_strided_slice %0 {offsets = [2, 0], sizes = [1, 128], strides = [1, 1]} : vector<3x128xf32> to vector<1x128xf32>
    %344 = vector.broadcast %342 : vector<8x1xf32> to vector<8x128xf32>
    %345 = vector.broadcast %343 : vector<1x128xf32> to vector<8x128xf32>
    %346 = arith.mulf %344, %345 : vector<8x128xf32>
    %347 = arith.addf %341, %346 : vector<8x128xf32>
    %cst_79 = arith.constant 0.000000e+00 : f32
    %348 = vector.broadcast %cst_79 : f32 to vector<8x128xf32>
    %349 = arith.maximumf %347, %348 : vector<8x128xf32>
    %350 = vector.broadcast %328 : vector<8x1xf32> to vector<8x128xf32>
    %351 = arith.mulf %349, %350 : vector<8x128xf32>
    %352 = arith.addf %325, %351 : vector<8x128xf32>
    %c104 = arith.constant 104 : index
    %c0_80 = arith.constant 0 : index
    %353 = vector.load %arg2[%c104, %c0_80] : memref<128x3xf32, #tpu.memory_space<vmem>>, vector<8x3xf32>
    %c104_81 = arith.constant 104 : index
    %c0_82 = arith.constant 0 : index
    %354 = vector.load %arg3[%c104_81, %c0_82] : memref<128x1xf32, #tpu.memory_space<vmem>>, vector<8x1xf32>
    %c104_83 = arith.constant 104 : index
    %c0_84 = arith.constant 0 : index
    %355 = vector.load %arg4[%c104_83, %c0_84] : memref<128x1xf32, #tpu.memory_space<vmem>>, vector<8x1xf32>
    %356 = vector.extract_strided_slice %353 {offsets = [0, 0], sizes = [8, 1], strides = [1, 1]} : vector<8x3xf32> to vector<8x1xf32>
    %357 = vector.extract_strided_slice %0 {offsets = [0, 0], sizes = [1, 128], strides = [1, 1]} : vector<3x128xf32> to vector<1x128xf32>
    %358 = vector.broadcast %356 : vector<8x1xf32> to vector<8x128xf32>
    %359 = vector.broadcast %357 : vector<1x128xf32> to vector<8x128xf32>
    %360 = arith.mulf %358, %359 : vector<8x128xf32>
    %361 = vector.broadcast %354 : vector<8x1xf32> to vector<8x128xf32>
    %362 = arith.addf %361, %360 : vector<8x128xf32>
    %363 = vector.extract_strided_slice %353 {offsets = [0, 1], sizes = [8, 1], strides = [1, 1]} : vector<8x3xf32> to vector<8x1xf32>
    %364 = vector.extract_strided_slice %0 {offsets = [1, 0], sizes = [1, 128], strides = [1, 1]} : vector<3x128xf32> to vector<1x128xf32>
    %365 = vector.broadcast %363 : vector<8x1xf32> to vector<8x128xf32>
    %366 = vector.broadcast %364 : vector<1x128xf32> to vector<8x128xf32>
    %367 = arith.mulf %365, %366 : vector<8x128xf32>
    %368 = arith.addf %362, %367 : vector<8x128xf32>
    %369 = vector.extract_strided_slice %353 {offsets = [0, 2], sizes = [8, 1], strides = [1, 1]} : vector<8x3xf32> to vector<8x1xf32>
    %370 = vector.extract_strided_slice %0 {offsets = [2, 0], sizes = [1, 128], strides = [1, 1]} : vector<3x128xf32> to vector<1x128xf32>
    %371 = vector.broadcast %369 : vector<8x1xf32> to vector<8x128xf32>
    %372 = vector.broadcast %370 : vector<1x128xf32> to vector<8x128xf32>
    %373 = arith.mulf %371, %372 : vector<8x128xf32>
    %374 = arith.addf %368, %373 : vector<8x128xf32>
    %cst_85 = arith.constant 0.000000e+00 : f32
    %375 = vector.broadcast %cst_85 : f32 to vector<8x128xf32>
    %376 = arith.maximumf %374, %375 : vector<8x128xf32>
    %377 = vector.broadcast %355 : vector<8x1xf32> to vector<8x128xf32>
    %378 = arith.mulf %376, %377 : vector<8x128xf32>
    %379 = arith.addf %352, %378 : vector<8x128xf32>
    %c112 = arith.constant 112 : index
    %c0_86 = arith.constant 0 : index
    %380 = vector.load %arg2[%c112, %c0_86] : memref<128x3xf32, #tpu.memory_space<vmem>>, vector<8x3xf32>
    %c112_87 = arith.constant 112 : index
    %c0_88 = arith.constant 0 : index
    %381 = vector.load %arg3[%c112_87, %c0_88] : memref<128x1xf32, #tpu.memory_space<vmem>>, vector<8x1xf32>
    %c112_89 = arith.constant 112 : index
    %c0_90 = arith.constant 0 : index
    %382 = vector.load %arg4[%c112_89, %c0_90] : memref<128x1xf32, #tpu.memory_space<vmem>>, vector<8x1xf32>
    %383 = vector.extract_strided_slice %380 {offsets = [0, 0], sizes = [8, 1], strides = [1, 1]} : vector<8x3xf32> to vector<8x1xf32>
    %384 = vector.extract_strided_slice %0 {offsets = [0, 0], sizes = [1, 128], strides = [1, 1]} : vector<3x128xf32> to vector<1x128xf32>
    %385 = vector.broadcast %383 : vector<8x1xf32> to vector<8x128xf32>
    %386 = vector.broadcast %384 : vector<1x128xf32> to vector<8x128xf32>
    %387 = arith.mulf %385, %386 : vector<8x128xf32>
    %388 = vector.broadcast %381 : vector<8x1xf32> to vector<8x128xf32>
    %389 = arith.addf %388, %387 : vector<8x128xf32>
    %390 = vector.extract_strided_slice %380 {offsets = [0, 1], sizes = [8, 1], strides = [1, 1]} : vector<8x3xf32> to vector<8x1xf32>
    %391 = vector.extract_strided_slice %0 {offsets = [1, 0], sizes = [1, 128], strides = [1, 1]} : vector<3x128xf32> to vector<1x128xf32>
    %392 = vector.broadcast %390 : vector<8x1xf32> to vector<8x128xf32>
    %393 = vector.broadcast %391 : vector<1x128xf32> to vector<8x128xf32>
    %394 = arith.mulf %392, %393 : vector<8x128xf32>
    %395 = arith.addf %389, %394 : vector<8x128xf32>
    %396 = vector.extract_strided_slice %380 {offsets = [0, 2], sizes = [8, 1], strides = [1, 1]} : vector<8x3xf32> to vector<8x1xf32>
    %397 = vector.extract_strided_slice %0 {offsets = [2, 0], sizes = [1, 128], strides = [1, 1]} : vector<3x128xf32> to vector<1x128xf32>
    %398 = vector.broadcast %396 : vector<8x1xf32> to vector<8x128xf32>
    %399 = vector.broadcast %397 : vector<1x128xf32> to vector<8x128xf32>
    %400 = arith.mulf %398, %399 : vector<8x128xf32>
    %401 = arith.addf %395, %400 : vector<8x128xf32>
    %cst_91 = arith.constant 0.000000e+00 : f32
    %402 = vector.broadcast %cst_91 : f32 to vector<8x128xf32>
    %403 = arith.maximumf %401, %402 : vector<8x128xf32>
    %404 = vector.broadcast %382 : vector<8x1xf32> to vector<8x128xf32>
    %405 = arith.mulf %403, %404 : vector<8x128xf32>
    %406 = arith.addf %379, %405 : vector<8x128xf32>
    %c120 = arith.constant 120 : index
    %c0_92 = arith.constant 0 : index
    %407 = vector.load %arg2[%c120, %c0_92] : memref<128x3xf32, #tpu.memory_space<vmem>>, vector<8x3xf32>
    %c120_93 = arith.constant 120 : index
    %c0_94 = arith.constant 0 : index
    %408 = vector.load %arg3[%c120_93, %c0_94] : memref<128x1xf32, #tpu.memory_space<vmem>>, vector<8x1xf32>
    %c120_95 = arith.constant 120 : index
    %c0_96 = arith.constant 0 : index
    %409 = vector.load %arg4[%c120_95, %c0_96] : memref<128x1xf32, #tpu.memory_space<vmem>>, vector<8x1xf32>
    %410 = vector.extract_strided_slice %407 {offsets = [0, 0], sizes = [8, 1], strides = [1, 1]} : vector<8x3xf32> to vector<8x1xf32>
    %411 = vector.extract_strided_slice %0 {offsets = [0, 0], sizes = [1, 128], strides = [1, 1]} : vector<3x128xf32> to vector<1x128xf32>
    %412 = vector.broadcast %410 : vector<8x1xf32> to vector<8x128xf32>
    %413 = vector.broadcast %411 : vector<1x128xf32> to vector<8x128xf32>
    %414 = arith.mulf %412, %413 : vector<8x128xf32>
    %415 = vector.broadcast %408 : vector<8x1xf32> to vector<8x128xf32>
    %416 = arith.addf %415, %414 : vector<8x128xf32>
    %417 = vector.extract_strided_slice %407 {offsets = [0, 1], sizes = [8, 1], strides = [1, 1]} : vector<8x3xf32> to vector<8x1xf32>
    %418 = vector.extract_strided_slice %0 {offsets = [1, 0], sizes = [1, 128], strides = [1, 1]} : vector<3x128xf32> to vector<1x128xf32>
    %419 = vector.broadcast %417 : vector<8x1xf32> to vector<8x128xf32>
    %420 = vector.broadcast %418 : vector<1x128xf32> to vector<8x128xf32>
    %421 = arith.mulf %419, %420 : vector<8x128xf32>
    %422 = arith.addf %416, %421 : vector<8x128xf32>
    %423 = vector.extract_strided_slice %407 {offsets = [0, 2], sizes = [8, 1], strides = [1, 1]} : vector<8x3xf32> to vector<8x1xf32>
    %424 = vector.extract_strided_slice %0 {offsets = [2, 0], sizes = [1, 128], strides = [1, 1]} : vector<3x128xf32> to vector<1x128xf32>
    %425 = vector.broadcast %423 : vector<8x1xf32> to vector<8x128xf32>
    %426 = vector.broadcast %424 : vector<1x128xf32> to vector<8x128xf32>
    %427 = arith.mulf %425, %426 : vector<8x128xf32>
    %428 = arith.addf %422, %427 : vector<8x128xf32>
    %cst_97 = arith.constant 0.000000e+00 : f32
    %429 = vector.broadcast %cst_97 : f32 to vector<8x128xf32>
    %430 = arith.maximumf %428, %429 : vector<8x128xf32>
    %431 = vector.broadcast %409 : vector<8x1xf32> to vector<8x128xf32>
    %432 = arith.mulf %430, %431 : vector<8x128xf32>
    %433 = arith.addf %406, %432 : vector<8x128xf32>
    %cst_98 = arith.constant dense<0.000000e+00> : vector<128xf32>
    %434 = vector.multi_reduction <add>, %433, %cst_98 [0] : vector<8x128xf32> to vector<128xf32>
    %435 = vector.shape_cast %434 : vector<128xf32> to vector<1x128xf32>
    %c0_99 = arith.constant 0 : index
    %c0_100 = arith.constant 0 : index
    %436 = memref.load %arg5[%c0_99, %c0_100] : memref<1x1xf32, #tpu.memory_space<smem>>
    %437 = vector.broadcast %436 : f32 to vector<1x128xf32>
    %438 = arith.addf %435, %437 : vector<1x128xf32>
    %c0_101 = arith.constant 0 : index
    %c0_102 = arith.constant 0 : index
    %439 = vector.load %arg6[%c0_101, %c0_102] : memref<1x128xf32, #tpu.memory_space<vmem>>, vector<1x128xf32>
    tpu.vector_store %arg6[%c0_101, %c0_102], %438 {strides = array<i32>} : memref<1x128xf32, #tpu.memory_space<vmem>>, vector<1x128xf32>,
    return
  }
  func.func @transform_0(%arg0: i32) -> (i32, i32) {
    %c0_i32 = arith.constant 0 : i32
    %c0_i32_0 = arith.constant 0 : i32
    return %c0_i32, %arg0 : i32, i32
  }
  func.func @transform_1(%arg0: i32) -> (i32, i32) {
    %c0_i32 = arith.constant 0 : i32
    %c0_i32_0 = arith.constant 0 : i32
    %c0_i32_1 = arith.constant 0 : i32
    return %c0_i32, %c0_i32_0 : i32, i32
  }
  func.func @transform_2(%arg0: i32) -> (i32, i32) {
    %c0_i32 = arith.constant 0 : i32
    %c0_i32_0 = arith.constant 0 : i32
    %c0_i32_1 = arith.constant 0 : i32
    return %c0_i32, %c0_i32_0 : i32, i32
  }
  func.func @transform_3(%arg0: i32) -> (i32, i32) {
    %c0_i32 = arith.constant 0 : i32
    %c0_i32_0 = arith.constant 0 : i32
    %c0_i32_1 = arith.constant 0 : i32
    return %c0_i32, %c0_i32_0 : i32, i32
  }
  func.func @transform_4(%arg0: i32) -> (i32, i32) {
    %c0_i32 = arith.constant 0 : i32
    %c0_i32_0 = arith.constant 0 : i32
    %c0_i32_1 = arith.constant 0 : i32
    return %c0_i32, %c0_i32_0 : i32, i32
  }
  func.func @transform_5(%arg0: i32) -> (i32, i32) {
    %c0_i32 = arith.constant 0 : i32
    %c0_i32_0 = arith.constant 0 : i32
    return %c0_i32, %arg0 : i32, i32
  }
}

</mosaic_0001>

<llo_original>
// kernel: value_net_forward.1
$region0: #{value_net_forward.1}
  #allocation0 [shape = 'u32[]', space=smem, size = 0x4, offset = 0x4, fixed_abs, tag = 'smem constant byte address 0x4 - core index']
  #allocation1 [shape = 'u32[144,128]{1,0:T(1,128)}', space=vmem, size = 0x12000, scoped, tag = 'internal scratch']
  #allocation2 [shape = 'f32[1,1]{1,0:T(1,128)S(6)}', space=smem, size = 0x200, scoped, tag = 'scoped memory for value_net_forward.1']
  %s0 = inlined_call_operand.vmem [shape: f32[3,128], index: 0, kind: input, shape index: {}]
  %s1 = inlined_call_operand.vmem [shape: f32[128,3], index: 1, kind: input, shape index: {}]
  %s2 = inlined_call_operand.vmem [shape: f32[128,1], index: 2, kind: input, shape index: {}]
  %s3 = inlined_call_operand.vmem [shape: f32[128,1], index: 3, kind: input, shape index: {}]
  %s4 = inlined_call_operand.<no memory space> [shape: f32[1,1], index: 4, kind: input, shape index: {}]
  %s5 = inlined_call_operand.vmem [shape: f32[1,128], index: 5, kind: output, shape index: {}]
  %s6 = sld [smem:[#allocation0]]
  $region30: #{value_net_forward.1} parent=0
    _
  %s8 = ssub.s32 1, %s6
  %s9 = scalar_select 0, %s8, %s6
  %10 = sst [smem:[#allocation2]] %s4
  // Predicated region
  $region2: #{value_net_forward.1} parent=0 // pred_check
    _
  $region3: #{value_net_forward.1} parent=0 // pred_check_branch
    %12 = sbr.rel (0) target = $region5
  $region4: #{value_net_forward.1} parent=0 // pred_region
    _
  $region5: #{value_net_forward.1} parent=0 // pred_fallthru
    _
  // Predicated region
  $region6: #{value_net_forward.1} parent=0 // pred_check
    _
  $region7: #{value_net_forward.1} parent=0 // pred_check_branch
    %14 = sbr.rel (0) target = $region9
  $region8: #{value_net_forward.1} parent=0 // pred_region
    _
  $region9: #{value_net_forward.1} parent=0 // pred_fallthru
    _
  // Predicated region
  $region10: #{value_net_forward.1} parent=0 // pred_check
    _
  $region11: #{value_net_forward.1} parent=0 // pred_check_branch
    %16 = sbr.rel (0) target = $region13
  $region12: #{value_net_forward.1} parent=0 // pred_region
    _
  $region13: #{value_net_forward.1} parent=0 // pred_fallthru
    _
  // Predicated region
  $region14: #{value_net_forward.1} parent=0 // pred_check
    _
  $region15: #{value_net_forward.1} parent=0 // pred_check_branch
    %18 = sbr.rel (0) target = $region17
  $region16: #{value_net_forward.1} parent=0 // pred_region
    _
  $region17: #{value_net_forward.1} parent=0 // pred_fallthru
    _
  // Predicated region
  $region18: #{value_net_forward.1} parent=0 // pred_check
    _
  $region19: #{value_net_forward.1} parent=0 // pred_check_branch
    %20 = sbr.rel (0) target = $region21
  $region20: #{value_net_forward.1} parent=0 // pred_region
    _
  $region21: #{value_net_forward.1} parent=0 // pred_fallthru
    _
  %v21 = vld [vmem:[%s0] sm:$0x7]
  %v22 = vld [vmem:[%s1] sm:$0xff]
  %v23 = vld [vmem:[%s2] sm:$0xff]
  %v24 = vld [vmem:[%s3] sm:$0xff]
  %26 = vset.pattern.permute.xlu0 0
  %27 = vperm.xlu0 %26, %v22
  %v28 = vpop.permute.xlu0 %27
  %v30 = vlaneseq
  %v31 = vshrl.u32 %v30, 7
  %v32 = vsub.s32 0, %v31
  %v33 = vrot.slane %v21, %v32
  %v34 = vmul.f32 %v28, %v33
  %36 = vset.pattern.permute.xlu0 0
  %37 = vperm.xlu0 %36, %v23
  %v38 = vpop.permute.xlu0 %37
  %v40 = vadd.f32 %v38, %v34
  %41 = vset.pattern.permute.xlu0 1
  %42 = vperm.xlu0 %41, %v22
  %v43 = vpop.permute.xlu0 %42
  %v45 = vlaneseq
  %v46 = vshrl.u32 %v45, 7
  %v47 = vsub.s32 1, %v46
  %v48 = vrot.slane %v21, %v47
  %v49 = vmul.f32 %v43, %v48
  %v50 = vadd.f32 %v40, %v49
  %51 = vset.pattern.permute.xlu0 2
  %52 = vperm.xlu0 %51, %v22
  %v53 = vpop.permute.xlu0 %52
  %v55 = vlaneseq
  %v56 = vshrl.u32 %v55, 7
  %v57 = vsub.s32 2, %v56
  %v58 = vrot.slane %v21, %v57
  %v59 = vmul.f32 %v53, %v58
  %v60 = vadd.f32 %v50, %v59
  %v61 = vmax.f32 %v60, 0.0
  %63 = vset.pattern.permute.xlu0 0
  %64 = vperm.xlu0 %63, %v24
  %v65 = vpop.permute.xlu0 %64
  %v67 = vmul.f32 %v61, %v65
  %v68 = vadd.f32 %v67, 0.0
  %v69 = vld [vmem:[%s1 + $0x8] sm:$0xff]
  %v70 = vld [vmem:[%s2 + $0x8] sm:$0xff]
  %v71 = vld [vmem:[%s3 + $0x8] sm:$0xff]
  %73 = vset.pattern.permute.xlu0 0
  %74 = vperm.xlu0 %73, %v69
  %v75 = vpop.permute.xlu0 %74
  %v77 = vmul.f32 %v75, %v33
  %79 = vset.pattern.permute.xlu0 0
  %80 = vperm.xlu0 %79, %v70
  %v81 = vpop.permute.xlu0 %80
  %v83 = vadd.f32 %v81, %v77
  %84 = vset.pattern.permute.xlu0 1
  %85 = vperm.xlu0 %84, %v69
  %v86 = vpop.permute.xlu0 %85
  %v88 = vmul.f32 %v86, %v48
  %v89 = vadd.f32 %v83, %v88
  %90 = vset.pattern.permute.xlu0 2
  %91 = vperm.xlu0 %90, %v69
  %v92 = vpop.permute.xlu0 %91
  %v94 = vmul.f32 %v92, %v58
  %v95 = vadd.f32 %v89, %v94
  %v96 = vmax.f32 %v95, 0.0
  %98 = vset.pattern.permute.xlu0 0
  %99 = vperm.xlu0 %98, %v71
  %v100 = vpop.permute.xlu0 %99
  %v102 = vmul.f32 %v96, %v100
  %v103 = vadd.f32 %v68, %v102
  %v104 = vld [vmem:[%s1 + $0x10] sm:$0xff]
  %v105 = vld [vmem:[%s2 + $0x10] sm:$0xff]
  %v106 = vld [vmem:[%s3 + $0x10] sm:$0xff]
  %108 = vset.pattern.permute.xlu0 0
  %109 = vperm.xlu0 %108, %v104
  %v110 = vpop.permute.xlu0 %109
  %v112 = vmul.f32 %v110, %v33
  %114 = vset.pattern.permute.xlu0 0
  %115 = vperm.xlu0 %114, %v105
  %v116 = vpop.permute.xlu0 %115
  %v118 = vadd.f32 %v116, %v112
  %119 = vset.pattern.permute.xlu0 1
  %120 = vperm.xlu0 %119, %v104
  %v121 = vpop.permute.xlu0 %120
  %v123 = vmul.f32 %v121, %v48
  %v124 = vadd.f32 %v118, %v123
  %125 = vset.pattern.permute.xlu0 2
  %126 = vperm.xlu0 %125, %v104
  %v127 = vpop.permute.xlu0 %126
  %v129 = vmul.f32 %v127, %v58
  %v130 = vadd.f32 %v124, %v129
  %v131 = vmax.f32 %v130, 0.0
  %133 = vset.pattern.permute.xlu0 0
  %134 = vperm.xlu0 %133, %v106
  %v135 = vpop.permute.xlu0 %134
  %v137 = vmul.f32 %v131, %v135
  %v138 = vadd.f32 %v103, %v137
  %v139 = vld [vmem:[%s1 + $0x18] sm:$0xff]
  %v140 = vld [vmem:[%s2 + $0x18] sm:$0xff]
  %v141 = vld [vmem:[%s3 + $0x18] sm:$0xff]
  %143 = vset.pattern.permute.xlu0 0
  %144 = vperm.xlu0 %143, %v139
  %v145 = vpop.permute.xlu0 %144
  %v147 = vmul.f32 %v145, %v33
  %149 = vset.pattern.permute.xlu0 0
  %150 = vperm.xlu0 %149, %v140
  %v151 = vpop.permute.xlu0 %150
  %v153 = vadd.f32 %v151, %v147
  %154 = vset.pattern.permute.xlu0 1
  %155 = vperm.xlu0 %154, %v139
  %v156 = vpop.permute.xlu0 %155
  %v158 = vmul.f32 %v156, %v48
  %v159 = vadd.f32 %v153, %v158
  %160 = vset.pattern.permute.xlu0 2
  %161 = vperm.xlu0 %160, %v139
  %v162 = vpop.permute.xlu0 %161
  %v164 = vmul.f32 %v162, %v58
  %v165 = vadd.f32 %v159, %v164
  %v166 = vmax.f32 %v165, 0.0
  %168 = vset.pattern.permute.xlu0 0
  %169 = vperm.xlu0 %168, %v141
  %v170 = vpop.permute.xlu0 %169
  %v172 = vmul.f32 %v166, %v170
  %v173 = vadd.f32 %v138, %v172
  %v174 = vld [vmem:[%s1 + $0x20] sm:$0xff]
  %v175 = vld [vmem:[%s2 + $0x20] sm:$0xff]
  %v176 = vld [vmem:[%s3 + $0x20] sm:$0xff]
  %178 = vset.pattern.permute.xlu0 0
  %179 = vperm.xlu0 %178, %v174
  %v180 = vpop.permute.xlu0 %179
  %v182 = vmul.f32 %v180, %v33
  %184 = vset.pattern.permute.xlu0 0
  %185 = vperm.xlu0 %184, %v175
  %v186 = vpop.permute.xlu0 %185
  %v188 = vadd.f32 %v186, %v182
  %189 = vset.pattern.permute.xlu0 1
  %190 = vperm.xlu0 %189, %v174
  %v191 = vpop.permute.xlu0 %190
  %v193 = vmul.f32 %v191, %v48
  %v194 = vadd.f32 %v188, %v193
  %195 = vset.pattern.permute.xlu0 2
  %196 = vperm.xlu0 %195, %v174
  %v197 = vpop.permute.xlu0 %196
  %v199 = vmul.f32 %v197, %v58
  %v200 = vadd.f32 %v194, %v199
  %v201 = vmax.f32 %v200, 0.0
  %203 = vset.pattern.permute.xlu0 0
  %204 = vperm.xlu0 %203, %v176
  %v205 = vpop.permute.xlu0 %204
  %v207 = vmul.f32 %v201, %v205
  %v208 = vadd.f32 %v173, %v207
  %v209 = vld [vmem:[%s1 + $0x28] sm:$0xff]
  %v210 = vld [vmem:[%s2 + $0x28] sm:$0xff]
  %v211 = vld [vmem:[%s3 + $0x28] sm:$0xff]
  %213 = vset.pattern.permute.xlu0 0
  %214 = vperm.xlu0 %213, %v209
  %v215 = vpop.permute.xlu0 %214
  %v217 = vmul.f32 %v215, %v33
  %219 = vset.pattern.permute.xlu0 0
  %220 = vperm.xlu0 %219, %v210
  %v221 = vpop.permute.xlu0 %220
  %v223 = vadd.f32 %v221, %v217
  %224 = vset.pattern.permute.xlu0 1
  %225 = vperm.xlu0 %224, %v209
  %v226 = vpop.permute.xlu0 %225
  %v228 = vmul.f32 %v226, %v48
  %v229 = vadd.f32 %v223, %v228
  %230 = vset.pattern.permute.xlu0 2
  %231 = vperm.xlu0 %230, %v209
  %v232 = vpop.permute.xlu0 %231
  %v234 = vmul.f32 %v232, %v58
  %v235 = vadd.f32 %v229, %v234
  %v236 = vmax.f32 %v235, 0.0
  %238 = vset.pattern.permute.xlu0 0
  %239 = vperm.xlu0 %238, %v211
  %v240 = vpop.permute.xlu0 %239
  %v242 = vmul.f32 %v236, %v240
  %v243 = vadd.f32 %v208, %v242
  %v244 = vld [vmem:[%s1 + $0x30] sm:$0xff]
  %v245 = vld [vmem:[%s2 + $0x30] sm:$0xff]
  %v246 = vld [vmem:[%s3 + $0x30] sm:$0xff]
  %248 = vset.pattern.permute.xlu0 0
  %249 = vperm.xlu0 %248, %v244
  %v250 = vpop.permute.xlu0 %249
  %v252 = vmul.f32 %v250, %v33
  %254 = vset.pattern.permute.xlu0 0
  %255 = vperm.xlu0 %254, %v245
  %v256 = vpop.permute.xlu0 %255
  %v258 = vadd.f32 %v256, %v252
  %259 = vset.pattern.permute.xlu0 1
  %260 = vperm.xlu0 %259, %v244
  %v261 = vpop.permute.xlu0 %260
  %v263 = vmul.f32 %v261, %v48
  %v264 = vadd.f32 %v258, %v263
  %265 = vset.pattern.permute.xlu0 2
  %266 = vperm.xlu0 %265, %v244
  %v267 = vpop.permute.xlu0 %266
  %v269 = vmul.f32 %v267, %v58
  %v270 = vadd.f32 %v264, %v269
  %v271 = vmax.f32 %v270, 0.0
  %273 = vset.pattern.permute.xlu0 0
  %274 = vperm.xlu0 %273, %v246
  %v275 = vpop.permute.xlu0 %274
  %v277 = vmul.f32 %v271, %v275
  %v278 = vadd.f32 %v243, %v277
  %v279 = vld [vmem:[%s1 + $0x38] sm:$0xff]
  %v280 = vld [vmem:[%s2 + $0x38] sm:$0xff]
  %v281 = vld [vmem:[%s3 + $0x38] sm:$0xff]
  %283 = vset.pattern.permute.xlu0 0
  %284 = vperm.xlu0 %283, %v279
  %v285 = vpop.permute.xlu0 %284
  %v287 = vmul.f32 %v285, %v33
  %289 = vset.pattern.permute.xlu0 0
  %290 = vperm.xlu0 %289, %v280
  %v291 = vpop.permute.xlu0 %290
  %v293 = vadd.f32 %v291, %v287
  %294 = vset.pattern.permute.xlu0 1
  %295 = vperm.xlu0 %294, %v279
  %v296 = vpop.permute.xlu0 %295
  %v298 = vmul.f32 %v296, %v48
  %v299 = vadd.f32 %v293, %v298
  %300 = vset.pattern.permute.xlu0 2
  %301 = vperm.xlu0 %300, %v279
  %v302 = vpop.permute.xlu0 %301
  %v304 = vmul.f32 %v302, %v58
  %v305 = vadd.f32 %v299, %v304
  %v306 = vmax.f32 %v305, 0.0
  %308 = vset.pattern.permute.xlu0 0
  %309 = vperm.xlu0 %308, %v281
  %v310 = vpop.permute.xlu0 %309
  %v312 = vmul.f32 %v306, %v310
  %v313 = vadd.f32 %v278, %v312
  %v314 = vld [vmem:[%s1 + $0x40] sm:$0xff]
  %v315 = vld [vmem:[%s2 + $0x40] sm:$0xff]
  %v316 = vld [vmem:[%s3 + $0x40] sm:$0xff]
  %318 = vset.pattern.permute.xlu0 0
  %319 = vperm.xlu0 %318, %v314
  %v320 = vpop.permute.xlu0 %319
  %v322 = vmul.f32 %v320, %v33
  %324 = vset.pattern.permute.xlu0 0
  %325 = vperm.xlu0 %324, %v315
  %v326 = vpop.permute.xlu0 %325
  %v328 = vadd.f32 %v326, %v322
  %329 = vset.pattern.permute.xlu0 1
  %330 = vperm.xlu0 %329, %v314
  %v331 = vpop.permute.xlu0 %330
  %v333 = vmul.f32 %v331, %v48
  %v334 = vadd.f32 %v328, %v333
  %335 = vset.pattern.permute.xlu0 2
  %336 = vperm.xlu0 %335, %v314
  %v337 = vpop.permute.xlu0 %336
  %v339 = vmul.f32 %v337, %v58
  %v340 = vadd.f32 %v334, %v339
  %v341 = vmax.f32 %v340, 0.0
  %343 = vset.pattern.permute.xlu0 0
  %344 = vperm.xlu0 %343, %v316
  %v345 = vpop.permute.xlu0 %344
  %v347 = vmul.f32 %v341, %v345
  %v348 = vadd.f32 %v313, %v347
  %v349 = vld [vmem:[%s1 + $0x48] sm:$0xff]
  %v350 = vld [vmem:[%s2 + $0x48] sm:$0xff]
  %v351 = vld [vmem:[%s3 + $0x48] sm:$0xff]
  %353 = vset.pattern.permute.xlu0 0
  %354 = vperm.xlu0 %353, %v349
  %v355 = vpop.permute.xlu0 %354
  %v357 = vmul.f32 %v355, %v33
  %359 = vset.pattern.permute.xlu0 0
  %360 = vperm.xlu0 %359, %v350
  %v361 = vpop.permute.xlu0 %360
  %v363 = vadd.f32 %v361, %v357
  %364 = vset.pattern.permute.xlu0 1
  %365 = vperm.xlu0 %364, %v349
  %v366 = vpop.permute.xlu0 %365
  %v368 = vmul.f32 %v366, %v48
  %v369 = vadd.f32 %v363, %v368
  %370 = vset.pattern.permute.xlu0 2
  %371 = vperm.xlu0 %370, %v349
  %v372 = vpop.permute.xlu0 %371
  %v374 = vmul.f32 %v372, %v58
  %v375 = vadd.f32 %v369, %v374
  %v376 = vmax.f32 %v375, 0.0
  %378 = vset.pattern.permute.xlu0 0
  %379 = vperm.xlu0 %378, %v351
  %v380 = vpop.permute.xlu0 %379
  %v382 = vmul.f32 %v376, %v380
  %v383 = vadd.f32 %v348, %v382
  %v384 = vld [vmem:[%s1 + $0x50] sm:$0xff]
  %v385 = vld [vmem:[%s2 + $0x50] sm:$0xff]
  %v386 = vld [vmem:[%s3 + $0x50] sm:$0xff]
  %388 = vset.pattern.permute.xlu0 0
  %389 = vperm.xlu0 %388, %v384
  %v390 = vpop.permute.xlu0 %389
  %v392 = vmul.f32 %v390, %v33
  %394 = vset.pattern.permute.xlu0 0
  %395 = vperm.xlu0 %394, %v385
  %v396 = vpop.permute.xlu0 %395
  %v398 = vadd.f32 %v396, %v392
  %399 = vset.pattern.permute.xlu0 1
  %400 = vperm.xlu0 %399, %v384
  %v401 = vpop.permute.xlu0 %400
  %v403 = vmul.f32 %v401, %v48
  %v404 = vadd.f32 %v398, %v403
  %405 = vset.pattern.permute.xlu0 2
  %406 = vperm.xlu0 %405, %v384
  %v407 = vpop.permute.xlu0 %406
  %v409 = vmul.f32 %v407, %v58
  %v410 = vadd.f32 %v404, %v409
  %v411 = vmax.f32 %v410, 0.0
  %413 = vset.pattern.permute.xlu0 0
  %414 = vperm.xlu0 %413, %v386
  %v415 = vpop.permute.xlu0 %414
  %v417 = vmul.f32 %v411, %v415
  %v418 = vadd.f32 %v383, %v417
  %v419 = vld [vmem:[%s1 + $0x58] sm:$0xff]
  %v420 = vld [vmem:[%s2 + $0x58] sm:$0xff]
  %v421 = vld [vmem:[%s3 + $0x58] sm:$0xff]
  %423 = vset.pattern.permute.xlu0 0
  %424 = vperm.xlu0 %423, %v419
  %v425 = vpop.permute.xlu0 %424
  %v427 = vmul.f32 %v425, %v33
  %429 = vset.pattern.permute.xlu0 0
  %430 = vperm.xlu0 %429, %v420
  %v431 = vpop.permute.xlu0 %430
  %v433 = vadd.f32 %v431, %v427
  %434 = vset.pattern.permute.xlu0 1
  %435 = vperm.xlu0 %434, %v419
  %v436 = vpop.permute.xlu0 %435
  %v438 = vmul.f32 %v436, %v48
  %v439 = vadd.f32 %v433, %v438
  %440 = vset.pattern.permute.xlu0 2
  %441 = vperm.xlu0 %440, %v419
  %v442 = vpop.permute.xlu0 %441
  %v444 = vmul.f32 %v442, %v58
  %v445 = vadd.f32 %v439, %v444
  %v446 = vmax.f32 %v445, 0.0
  %448 = vset.pattern.permute.xlu0 0
  %449 = vperm.xlu0 %448, %v421
  %v450 = vpop.permute.xlu0 %449
  %v452 = vmul.f32 %v446, %v450
  %v453 = vadd.f32 %v418, %v452
  %v454 = vld [vmem:[%s1 + $0x60] sm:$0xff]
  %v455 = vld [vmem:[%s2 + $0x60] sm:$0xff]
  %v456 = vld [vmem:[%s3 + $0x60] sm:$0xff]
  %458 = vset.pattern.permute.xlu0 0
  %459 = vperm.xlu0 %458, %v454
  %v460 = vpop.permute.xlu0 %459
  %v462 = vmul.f32 %v460, %v33
  %464 = vset.pattern.permute.xlu0 0
  %465 = vperm.xlu0 %464, %v455
  %v466 = vpop.permute.xlu0 %465
  %v468 = vadd.f32 %v466, %v462
  %469 = vset.pattern.permute.xlu0 1
  %470 = vperm.xlu0 %469, %v454
  %v471 = vpop.permute.xlu0 %470
  %v473 = vmul.f32 %v471, %v48
  %v474 = vadd.f32 %v468, %v473
  %475 = vset.pattern.permute.xlu0 2
  %476 = vperm.xlu0 %475, %v454
  %v477 = vpop.permute.xlu0 %476
  %v479 = vmul.f32 %v477, %v58
  %v480 = vadd.f32 %v474, %v479
  %v481 = vmax.f32 %v480, 0.0
  %483 = vset.pattern.permute.xlu0 0
  %484 = vperm.xlu0 %483, %v456
  %v485 = vpop.permute.xlu0 %484
  %v487 = vmul.f32 %v481, %v485
  %v488 = vadd.f32 %v453, %v487
  %v489 = vld [vmem:[%s1 + $0x68] sm:$0xff]
  %v490 = vld [vmem:[%s2 + $0x68] sm:$0xff]
  %v491 = vld [vmem:[%s3 + $0x68] sm:$0xff]
  %493 = vset.pattern.permute.xlu0 0
  %494 = vperm.xlu0 %493, %v489
  %v495 = vpop.permute.xlu0 %494
  %v497 = vmul.f32 %v495, %v33
  %499 = vset.pattern.permute.xlu0 0
  %500 = vperm.xlu0 %499, %v490
  %v501 = vpop.permute.xlu0 %500
  %v503 = vadd.f32 %v501, %v497
  %504 = vset.pattern.permute.xlu0 1
  %505 = vperm.xlu0 %504, %v489
  %v506 = vpop.permute.xlu0 %505
  %v508 = vmul.f32 %v506, %v48
  %v509 = vadd.f32 %v503, %v508
  %510 = vset.pattern.permute.xlu0 2
  %511 = vperm.xlu0 %510, %v489
  %v512 = vpop.permute.xlu0 %511
  %v514 = vmul.f32 %v512, %v58
  %v515 = vadd.f32 %v509, %v514
  %v516 = vmax.f32 %v515, 0.0
  %518 = vset.pattern.permute.xlu0 0
  %519 = vperm.xlu0 %518, %v491
  %v520 = vpop.permute.xlu0 %519
  %v522 = vmul.f32 %v516, %v520
  %v523 = vadd.f32 %v488, %v522
  %v524 = vld [vmem:[%s1 + $0x70] sm:$0xff]
  %v525 = vld [vmem:[%s2 + $0x70] sm:$0xff]
  %v526 = vld [vmem:[%s3 + $0x70] sm:$0xff]
  %528 = vset.pattern.permute.xlu0 0
  %529 = vperm.xlu0 %528, %v524
  %v530 = vpop.permute.xlu0 %529
  %v532 = vmul.f32 %v530, %v33
  %534 = vset.pattern.permute.xlu0 0
  %535 = vperm.xlu0 %534, %v525
  %v536 = vpop.permute.xlu0 %535
  %v538 = vadd.f32 %v536, %v532
  %539 = vset.pattern.permute.xlu0 1
  %540 = vperm.xlu0 %539, %v524
  %v541 = vpop.permute.xlu0 %540
  %v543 = vmul.f32 %v541, %v48
  %v544 = vadd.f32 %v538, %v543
  %545 = vset.pattern.permute.xlu0 2
  %546 = vperm.xlu0 %545, %v524
  %v547 = vpop.permute.xlu0 %546
  %v549 = vmul.f32 %v547, %v58
  %v550 = vadd.f32 %v544, %v549
  %v551 = vmax.f32 %v550, 0.0
  %553 = vset.pattern.permute.xlu0 0
  %554 = vperm.xlu0 %553, %v526
  %v555 = vpop.permute.xlu0 %554
  %v557 = vmul.f32 %v551, %v555
  %v558 = vadd.f32 %v523, %v557
  %v559 = vld [vmem:[%s1 + $0x78] sm:$0xff]
  %v560 = vld [vmem:[%s2 + $0x78] sm:$0xff]
  %v561 = vld [vmem:[%s3 + $0x78] sm:$0xff]
  %563 = vset.pattern.permute.xlu0 0
  %564 = vperm.xlu0 %563, %v559
  %v565 = vpop.permute.xlu0 %564
  %v567 = vmul.f32 %v565, %v33
  %569 = vset.pattern.permute.xlu0 0
  %570 = vperm.xlu0 %569, %v560
  %v571 = vpop.permute.xlu0 %570
  %v573 = vadd.f32 %v571, %v567
  %574 = vset.pattern.permute.xlu0 1
  %575 = vperm.xlu0 %574, %v559
  %v576 = vpop.permute.xlu0 %575
  %v578 = vmul.f32 %v576, %v48
  %v579 = vadd.f32 %v573, %v578
  %580 = vset.pattern.permute.xlu0 2
  %581 = vperm.xlu0 %580, %v559
  %v582 = vpop.permute.xlu0 %581
  %v584 = vmul.f32 %v582, %v58
  %v585 = vadd.f32 %v579, %v584
  %v586 = vmax.f32 %v585, 0.0
  %588 = vset.pattern.permute.xlu0 0
  %589 = vperm.xlu0 %588, %v561
  %v590 = vpop.permute.xlu0 %589
  %v592 = vmul.f32 %v586, %v590
  %v593 = vadd.f32 %v558, %v592
  %v594 = vrot.slane %v593, 4
  %v595 = vadd.f32 %v593, %v594
  %v596 = vrot.slane %v595, 2
  %v597 = vadd.f32 %v595, %v596
  %v598 = vrot.slane %v597, 1
  %v599 = vadd.f32 %v597, %v598
  %s600 = sld [smem:[#allocation2]]
  %v601 = vstv %s600
  %v602 = vadd.f32 %v599, %v601
  %603 = vst [vmem:[%s5] sm:$0x1] %v602
  // Predicated region
  $region22: #{value_net_forward.1} parent=0 // pred_check
    _
  $region23: #{value_net_forward.1} parent=0 // pred_check_branch
    %605 = sbr.rel (0) target = $region25
  $region24: #{value_net_forward.1} parent=0 // pred_region
    _
  $region25: #{value_net_forward.1} parent=0 // pred_fallthru
    _
  // Predicated region
  $region26: #{value_net_forward.1} parent=0 // pred_check
    _
  $region27: #{value_net_forward.1} parent=0 // pred_check_branch
    %607 = sbr.rel (0) target = $region29
  $region28: #{value_net_forward.1} parent=0 // pred_region
    _
  $region29: #{value_net_forward.1} parent=0 // pred_fallthru
    _

</llo_original>
